<compile_context>
chip_gen: v6e
topology: v6e:2x2x1
jax: 0.10.0
libtpu: 0.0.40
codegen_flags: <defaults>
</compile_context>

<pallas_src>
import jax
import jax.numpy as jnp
from jax.experimental import pallas as pl
from jax.experimental.pallas import tpu as pltpu


def _round_up(x, m):
    return ((x + m - 1) // m) * m


# ---------------------------------------------------------------------------
# Pallas kernel: dilated 1-D conv (groups=1), NCL orientation, L tiled.
# ---------------------------------------------------------------------------
def _make_conv1d_kernel(K: int, dilation: int, TL: int, W: int, C_out: int):
    def kernel(x_ref, w_ref, b_ref, o_ref, acc_ref):
        # x_ref  : (1, C_in, L_in_total)  whole padded sequence for batch b
        # w_ref  : (K, C_out, C_in)
        # b_ref  : (C_out, 1)
        # o_ref  : (1, C_out, TL)         lane-dense output tile
        # acc_ref: (C_out, TL) f32        VMEM scratch accumulator
        l = pl.program_id(1)
        base = pl.multiple_of(l * TL, 128)      # lane-aligned tile start
        xt = x_ref[0, :, pl.ds(base, W)]        # (C_in, W) aligned window load
        acc_ref[...] = jnp.broadcast_to(
            b_ref[...].astype(jnp.float32), acc_ref.shape)
        # TODO(synk): when K*C_in is tiny, fold the K taps into a single
        # (C_out, K*C_in) @ (K*C_in, TL) matmul (im2col) for MXU utilization.
        for k in range(K):                      # K is small & static -> unrolled
            off = k * dilation
            xk = xt[:, off:off + TL]            # static lane shift (XLU)
            acc_ref[...] += jnp.dot(w_ref[k], xk,
                                    preferred_element_type=jnp.float32)
        o_ref[0] = acc_ref[...].astype(o_ref.dtype)
    return kernel


# ---------------------------------------------------------------------------
# Wrapper reproducing SamePadConv.forward semantics (NCL in -> NCL out).
# ---------------------------------------------------------------------------
def same_pad_conv(x, weight, bias, *, dilation=1, groups=1, compute_dtype=None):
    """x: (B, C_in, L); weight: (C_out, C_in/groups, K); bias: (C_out,)."""
    assert groups == 1  # TODO(synk): grouped conv (groups > 1) not implemented.
    C_out, C_in_w, K = weight.shape
    B, C_in, L = x.shape
    assert C_in_w == C_in
    cdt = jnp.dtype(compute_dtype) if compute_dtype is not None else jnp.dtype(x.dtype)

    receptive_field = (K - 1) * dilation + 1
    padding = receptive_field // 2
    remove = 1 if receptive_field % 2 == 0 else 0
    L_conv = L + 2 * padding - receptive_field + 1
    L_out = L_conv - remove          # computing only the first L_out positions
    halo = receptive_field - 1       # == trimming out[:, :, :-remove]

    # Sequence tiling: output tiles are multiples of 128 lanes (lane-dense vst).
    L_out_p = _round_up(max(L_out, 1), 128)
    TL = max(t for t in (512, 256, 128) if L_out_p % t == 0)
    n_l = L_out_p // TL
    halo_up = _round_up(halo, 128) if halo > 0 else 0
    W = TL + halo_up                           # 128-aligned in-kernel window
    L_in_total = L_out_p + halo_up

    pad_right = L_in_total - L - padding
    assert pad_right >= 0

    # glue: conv 'same' padding + tile/halo tail padding in one pad call,
    # optional bf16 cast of activations & weights (accumulation stays f32).
    x_pad = jnp.pad(x.astype(cdt), ((0, 0), (0, 0), (padding, pad_right)))
    w_koi = jnp.transpose(weight, (2, 0, 1)).astype(cdt)       # (K, C_out, C_in)
    b2 = bias.reshape(C_out, 1).astype(jnp.float32)

    in_item = cdt.itemsize
    out_item = jnp.dtype(x.dtype).itemsize
    vmem_est = (2 * C_in * L_in_total * in_item        # double-buffered x block
                + 2 * C_out * TL * out_item            # double-buffered out block
                + 2 * K * C_out * C_in * in_item       # weights
                + 2 * C_out * 4                        # bias
                + C_out * TL * 4                       # f32 accumulator scratch
                + 2 * C_in * W * in_item)              # in-kernel window + shifts
    vmem_limit = int(min(128 << 20, max(32 << 20, 2 * vmem_est)))

    kernel = _make_conv1d_kernel(K, dilation, TL, W, C_out)
    out = pl.pallas_call(
        kernel,
        out_shape=jax.ShapeDtypeStruct((B, C_out, L_out_p), x.dtype),
        grid_spec=pltpu.PrefetchScalarGridSpec(
            num_scalar_prefetch=0,
            grid=(B, n_l),
            in_specs=[
                # x block index is constant across the l axis -> DMA'd once per
                # batch element; the output is L-tiled for pipelining.
                pl.BlockSpec((1, C_in, L_in_total), lambda b, l: (b, 0, 0)),
                pl.BlockSpec((K, C_out, C_in), lambda b, l: (0, 0, 0)),
                pl.BlockSpec((C_out, 1), lambda b, l: (0, 0)),
            ],
            out_specs=pl.BlockSpec((1, C_out, TL), lambda b, l: (b, 0, l)),
            scratch_shapes=[pltpu.VMEM((C_out, TL), jnp.float32)],
        ),
        compiler_params=pltpu.CompilerParams(
            dimension_semantics=("parallel", "parallel"),
            vmem_limit_bytes=vmem_limit),
    )(x_pad, w_koi, b2)

    if L_out_p != L_out:
        out = out[:, :, :L_out]
    return out


# ---------------------------------------------------------------------------
# Optional SpectralMaxNorm weight transform (eval-mode semantics), plain JAX glue.
# ---------------------------------------------------------------------------
def spectral_max_norm(weight, key, max_norm=1.0, eps=1e-12, init_power_iters=15):
    w_mat = weight.reshape(weight.shape[0], -1)
    h, w = w_mat.shape
    ku, kv = jax.random.split(key)
    u = jax.random.normal(ku, (h,), jnp.float32)
    u = u / (jnp.linalg.norm(u) + eps)
    v = jax.random.normal(kv, (w,), jnp.float32)
    v = v / (jnp.linalg.norm(v) + eps)
    for _ in range(init_power_iters):   # mimics _SpectralNorm.__init__ power method
        u = w_mat @ v
        u = u / (jnp.linalg.norm(u) + eps)
        v = w_mat.T @ u
        v = v / (jnp.linalg.norm(v) + eps)
    sigma = u @ (w_mat @ v)
    return jnp.where(sigma > max_norm, max_norm * weight / sigma, weight)


# ---------------------------------------------------------------------------
# Deterministic parameter init (matches nn.Conv1d default init scheme).
# ---------------------------------------------------------------------------
def init_same_pad_conv(key, in_channels, out_channels, kernel_size, groups=1):
    fan_in = (in_channels // groups) * kernel_size
    bound = 1.0 / jnp.sqrt(fan_in)
    kw, kb = jax.random.split(key)
    weight = jax.random.uniform(
        kw, (out_channels, in_channels // groups, kernel_size),
        jnp.float32, minval=-bound, maxval=bound)
    bias = jax.random.uniform(
        kb, (out_channels,), jnp.float32, minval=-bound, maxval=bound)
    return weight, bias


# ---------------------------------------------------------------------------
# Pure-JAX reference (lax conv) for correctness checking.
# ---------------------------------------------------------------------------
def _reference(x, weight, bias, dilation):
    C_out, _, K = weight.shape
    receptive_field = (K - 1) * dilation + 1
    padding = receptive_field // 2
    remove = 1 if receptive_field % 2 == 0 else 0
    out = jax.lax.conv_general_dilated(
        x, weight, window_strides=(1,), padding=[(padding, padding)],
        rhs_dilation=(dilation,), dimension_numbers=("NCH", "OIH", "NCH"))
    out = out + bias[None, :, None]
    if remove:
        out = out[:, :, :-remove]
    return out


if __name__ == "__main__":
    key = jax.random.PRNGKey(0)

    # (B, C_in, C_out, L, kernel_size, dilation)
    #  - even receptive field (kernel=4, dilation=1) -> exercises 'remove'
    #  - odd receptive field (kernel=3, dilation=2)  -> true same-pad
    #  - longer sequence -> exercises multi-tile grid + output tail trimming
    configs = [
        (2, 4, 8, 16, 4, 1),
        (2, 4, 8, 16, 3, 2),
        (2, 16, 32, 300, 3, 2),
    ]

    for (B, C_in, C_out, L, kernel_size, dilation) in configs:
        kx, kp, key = jax.random.split(key, 3)
        x = jax.random.normal(kx, (B, C_in, L), jnp.float32)
        weight, bias = init_same_pad_conv(kp, C_in, C_out, kernel_size)

        ref = _reference(x, weight, bias, dilation)

        # f32 compute path: must match the lax reference tightly.
        out = jax.block_until_ready(
            same_pad_conv(x, weight, bias, dilation=dilation))
        assert out.shape == ref.shape, (out.shape, ref.shape)
        err = float(jnp.max(jnp.abs(out - ref)))
        assert err < 1e-4, err

        # bf16 compute path (halved HBM traffic, MXU bf16; f32 accumulation).
        out_bf16 = jax.block_until_ready(
            same_pad_conv(x, weight, bias, dilation=dilation,
                          compute_dtype=jnp.bfloat16))
        assert out_bf16.shape == ref.shape, (out_bf16.shape, ref.shape)
        err_bf16 = float(jnp.max(jnp.abs(out_bf16 - ref)))
        assert err_bf16 < 1e-1, err_bf16

    print("KERNEL_OK")
</pallas_src>

<mosaic_0001>
module attributes {stable_mosaic.version = 11 : i64} {
  func.func @kernel(%arg0: i32, %arg1: i32, %arg2: memref<1x4x256xf32, #tpu.memory_space<vmem>>, %arg3: memref<4x8x4xf32, #tpu.memory_space<vmem>>, %arg4: memref<8x1xf32, #tpu.memory_space<vmem>>, %arg5: memref<1x8x128xf32, #tpu.memory_space<vmem>>, %arg6: memref<8x128xf32, #tpu.memory_space<vmem>>) attributes {dimension_semantics = [#tpu.dimension_semantics<parallel>, #tpu.dimension_semantics<parallel>], iteration_bounds = array<i64: 2, 1>, scalar_prefetch = 0 : i64, scratch_operands = 1 : i64, tpu.core_type = #tpu.core_type<tc>, window_params = [{transform_indices = @transform_0, window_bounds = array<i64: 1, 4, 256>}, {pipeline_mode = #tpu.pipeline_mode<synchronous>, transform_indices = @transform_1, window_bounds = array<i64: 4, 8, 4>}, {pipeline_mode = #tpu.pipeline_mode<synchronous>, transform_indices = @transform_2, window_bounds = array<i64: 8, 1>}, {transform_indices = @transform_3, window_bounds = array<i64: 1, 8, 128>}]} {
    %c128_i32 = arith.constant 128 : i32
    %0 = arith.muli %arg1, %c128_i32 : i32
    %1 = tpu.assume_multiple %0, 128 : i32
    %c0 = arith.constant 0 : index
    %c0_0 = arith.constant 0 : index
    %2 = arith.index_cast %1 : i32 to index
    %3 = vector.load %arg2[%c0, %c0_0, %2] : memref<1x4x256xf32, #tpu.memory_space<vmem>>, vector<1x4x256xf32>
    %4 = vector.shape_cast %3 : vector<1x4x256xf32> to vector<4x256xf32>
    %c0_1 = arith.constant 0 : index
    %c0_2 = arith.constant 0 : index
    %5 = vector.load %arg4[%c0_1, %c0_2] : memref<8x1xf32, #tpu.memory_space<vmem>>, vector<8x1xf32>
    %6 = vector.shape_cast %5 : vector<8x1xf32> to vector<8x1xf32>
    %7 = vector.broadcast %6 : vector<8x1xf32> to vector<8x128xf32>
    %c0_3 = arith.constant 0 : index
    %c0_4 = arith.constant 0 : index
    %8 = vector.load %arg6[%c0_3, %c0_4] : memref<8x128xf32, #tpu.memory_space<vmem>>, vector<8x128xf32>
    tpu.vector_store %arg6[%c0_3, %c0_4], %7 {strides = array<i32>} : memref<8x128xf32, #tpu.memory_space<vmem>>, vector<8x128xf32>,
    %9 = vector.extract_strided_slice %4 {offsets = [0, 0], sizes = [4, 128], strides = [1, 1]} : vector<4x256xf32> to vector<4x128xf32>
    %c0_5 = arith.constant 0 : index
    %c0_6 = arith.constant 0 : index
    %10 = vector.load %arg6[%c0_5, %c0_6] : memref<8x128xf32, #tpu.memory_space<vmem>>, vector<8x128xf32>
    %c0_7 = arith.constant 0 : index
    %c0_8 = arith.constant 0 : index
    %c0_9 = arith.constant 0 : index
    %11 = vector.load %arg3[%c0_7, %c0_8, %c0_9] : memref<4x8x4xf32, #tpu.memory_space<vmem>>, vector<1x8x4xf32>
    %12 = vector.shape_cast %11 : vector<1x8x4xf32> to vector<8x4xf32>
    %cst = arith.constant dense<0.000000e+00> : vector<8x128xf32>
    %13 = tpu.matmul %12, %9, %cst {dimension_numbers = #tpu.dot_dimension_numbers<[1], [0], [0], [1], [0, 0, 1, 1], [], []>} : vector<8x4xf32>, vector<4x128xf32>, vector<8x128xf32> -> vector<8x128xf32>
    %14 = arith.addf %10, %13 : vector<8x128xf32>
    %c0_10 = arith.constant 0 : index
    %c0_11 = arith.constant 0 : index
    %15 = vector.load %arg6[%c0_10, %c0_11] : memref<8x128xf32, #tpu.memory_space<vmem>>, vector<8x128xf32>
    tpu.vector_store %arg6[%c0_10, %c0_11], %14 {strides = array<i32>} : memref<8x128xf32, #tpu.memory_space<vmem>>, vector<8x128xf32>,
    %16 = vector.extract_strided_slice %4 {offsets = [0, 1], sizes = [4, 128], strides = [1, 1]} : vector<4x256xf32> to vector<4x128xf32>
    %c0_12 = arith.constant 0 : index
    %c0_13 = arith.constant 0 : index
    %17 = vector.load %arg6[%c0_12, %c0_13] : memref<8x128xf32, #tpu.memory_space<vmem>>, vector<8x128xf32>
    %c1 = arith.constant 1 : index
    %c0_14 = arith.constant 0 : index
    %c0_15 = arith.constant 0 : index
    %18 = vector.load %arg3[%c1, %c0_14, %c0_15] : memref<4x8x4xf32, #tpu.memory_space<vmem>>, vector<1x8x4xf32>
    %19 = vector.shape_cast %18 : vector<1x8x4xf32> to vector<8x4xf32>
    %cst_16 = arith.constant dense<0.000000e+00> : vector<8x128xf32>
    %20 = tpu.matmul %19, %16, %cst_16 {dimension_numbers = #tpu.dot_dimension_numbers<[1], [0], [0], [1], [0, 0, 1, 1], [], []>} : vector<8x4xf32>, vector<4x128xf32>, vector<8x128xf32> -> vector<8x128xf32>
    %21 = arith.addf %17, %20 : vector<8x128xf32>
    %c0_17 = arith.constant 0 : index
    %c0_18 = arith.constant 0 : index
    %22 = vector.load %arg6[%c0_17, %c0_18] : memref<8x128xf32, #tpu.memory_space<vmem>>, vector<8x128xf32>
    tpu.vector_store %arg6[%c0_17, %c0_18], %21 {strides = array<i32>} : memref<8x128xf32, #tpu.memory_space<vmem>>, vector<8x128xf32>,
    %23 = vector.extract_strided_slice %4 {offsets = [0, 2], sizes = [4, 128], strides = [1, 1]} : vector<4x256xf32> to vector<4x128xf32>
    %c0_19 = arith.constant 0 : index
    %c0_20 = arith.constant 0 : index
    %24 = vector.load %arg6[%c0_19, %c0_20] : memref<8x128xf32, #tpu.memory_space<vmem>>, vector<8x128xf32>
    %c2 = arith.constant 2 : index
    %c0_21 = arith.constant 0 : index
    %c0_22 = arith.constant 0 : index
    %25 = vector.load %arg3[%c2, %c0_21, %c0_22] : memref<4x8x4xf32, #tpu.memory_space<vmem>>, vector<1x8x4xf32>
    %26 = vector.shape_cast %25 : vector<1x8x4xf32> to vector<8x4xf32>
    %cst_23 = arith.constant dense<0.000000e+00> : vector<8x128xf32>
    %27 = tpu.matmul %26, %23, %cst_23 {dimension_numbers = #tpu.dot_dimension_numbers<[1], [0], [0], [1], [0, 0, 1, 1], [], []>} : vector<8x4xf32>, vector<4x128xf32>, vector<8x128xf32> -> vector<8x128xf32>
    %28 = arith.addf %24, %27 : vector<8x128xf32>
    %c0_24 = arith.constant 0 : index
    %c0_25 = arith.constant 0 : index
    %29 = vector.load %arg6[%c0_24, %c0_25] : memref<8x128xf32, #tpu.memory_space<vmem>>, vector<8x128xf32>
    tpu.vector_store %arg6[%c0_24, %c0_25], %28 {strides = array<i32>} : memref<8x128xf32, #tpu.memory_space<vmem>>, vector<8x128xf32>,
    %30 = vector.extract_strided_slice %4 {offsets = [0, 3], sizes = [4, 128], strides = [1, 1]} : vector<4x256xf32> to vector<4x128xf32>
    %c0_26 = arith.constant 0 : index
    %c0_27 = arith.constant 0 : index
    %31 = vector.load %arg6[%c0_26, %c0_27] : memref<8x128xf32, #tpu.memory_space<vmem>>, vector<8x128xf32>
    %c3 = arith.constant 3 : index
    %c0_28 = arith.constant 0 : index
    %c0_29 = arith.constant 0 : index
    %32 = vector.load %arg3[%c3, %c0_28, %c0_29] : memref<4x8x4xf32, #tpu.memory_space<vmem>>, vector<1x8x4xf32>
    %33 = vector.shape_cast %32 : vector<1x8x4xf32> to vector<8x4xf32>
    %cst_30 = arith.constant dense<0.000000e+00> : vector<8x128xf32>
    %34 = tpu.matmul %33, %30, %cst_30 {dimension_numbers = #tpu.dot_dimension_numbers<[1], [0], [0], [1], [0, 0, 1, 1], [], []>} : vector<8x4xf32>, vector<4x128xf32>, vector<8x128xf32> -> vector<8x128xf32>
    %35 = arith.addf %31, %34 : vector<8x128xf32>
    %c0_31 = arith.constant 0 : index
    %c0_32 = arith.constant 0 : index
    %36 = vector.load %arg6[%c0_31, %c0_32] : memref<8x128xf32, #tpu.memory_space<vmem>>, vector<8x128xf32>
    tpu.vector_store %arg6[%c0_31, %c0_32], %35 {strides = array<i32>} : memref<8x128xf32, #tpu.memory_space<vmem>>, vector<8x128xf32>,
    %c0_33 = arith.constant 0 : index
    %c0_34 = arith.constant 0 : index
    %37 = vector.load %arg6[%c0_33, %c0_34] : memref<8x128xf32, #tpu.memory_space<vmem>>, vector<8x128xf32>
    %c0_35 = arith.constant 0 : index
    %c0_36 = arith.constant 0 : index
    %c0_37 = arith.constant 0 : index
    %38 = vector.load %arg5[%c0_35, %c0_36, %c0_37] : memref<1x8x128xf32, #tpu.memory_space<vmem>>, vector<1x8x128xf32>
    %39 = vector.shape_cast %38 : vector<1x8x128xf32> to vector<8x128xf32>
    %40 = vector.shape_cast %37 : vector<8x128xf32> to vector<1x8x128xf32>
    tpu.vector_store %arg5[%c0_35, %c0_36, %c0_37], %40 {strides = array<i32>} : memref<1x8x128xf32, #tpu.memory_space<vmem>>, vector<1x8x128xf32>,
    return
  }
  func.func @transform_0(%arg0: i32, %arg1: i32) -> (i32, i32, i32) {
    %c0_i32 = arith.constant 0 : i32
    %c0_i32_0 = arith.constant 0 : i32
    %c0_i32_1 = arith.constant 0 : i32
    return %arg0, %c0_i32, %c0_i32_0 : i32, i32, i32
  }
  func.func @transform_1(%arg0: i32, %arg1: i32) -> (i32, i32, i32) {
    %c0_i32 = arith.constant 0 : i32
    %c0_i32_0 = arith.constant 0 : i32
    %c0_i32_1 = arith.constant 0 : i32
    %c0_i32_2 = arith.constant 0 : i32
    return %c0_i32, %c0_i32_0, %c0_i32_1 : i32, i32, i32
  }
  func.func @transform_2(%arg0: i32, %arg1: i32) -> (i32, i32) {
    %c0_i32 = arith.constant 0 : i32
    %c0_i32_0 = arith.constant 0 : i32
    %c0_i32_1 = arith.constant 0 : i32
    return %c0_i32, %c0_i32_0 : i32, i32
  }
  func.func @transform_3(%arg0: i32, %arg1: i32) -> (i32, i32, i32) {
    %c0_i32 = arith.constant 0 : i32
    %c0_i32_0 = arith.constant 0 : i32
    return %arg0, %c0_i32, %arg1 : i32, i32, i32
  }
}

</mosaic_0001>

<llo_original>
// kernel: tpu_custom_call.1
$region0: #{tpu_custom_call.1}
  #allocation0 [shape = 'u32[]', space=smem, size = 0x4, offset = 0x4, fixed_abs, tag = 'smem constant byte address 0x4 - core index']
  #allocation1 [shape = 'u32[144,128]{1,0:T(1,128)}', space=vmem, size = 0x12000, scoped, tag = 'internal scratch']
  #allocation2 [shape = 'f32[8,128]{1,0:T(8,128)}', space=vmem, size = 0x1000, scoped, tag = 'scratch operand']
  %s0 = inlined_call_operand.vmem [shape: f32[2,4,256], index: 0, kind: input, shape index: {}]
  %s1 = inlined_call_operand.vmem [shape: f32[4,8,4], index: 1, kind: input, shape index: {}]
  %s2 = inlined_call_operand.vmem [shape: f32[8,1], index: 2, kind: input, shape index: {}]
  %s3 = inlined_call_operand.hbm [shape: f32[2,8,128], index: 3, kind: output, shape index: {}]
  %s4 = sld [smem:[#allocation0]]
  $region45: #{tpu_custom_call.1} parent=0
    _
  %s6 = ssub.s32 1, %s4
  %s7 = scalar_select 0, %s6, %s4
  $region1: #{tpu_custom_call.1} parent=0
    #allocation3 [shape = 'u8[8192]{0}', space=vmem, size = 0x2000, scoped, tag = 'output window, operand 0']
    #allocation4 [shape = 's32[2]{0}', space=sflag, size = 0x8, scoped, tag = 'scoped memory for tpu_custom_call.1']
    %8 = vsyncpa [#allocation4], 0
    %s9 = scalar_lea.sflag [#allocation4], 1
    %10 = vsyncpa %s9, 0
    loop: start=0, step=1, limit=4
    $region2: #{tpu_custom_call.1} parent=1 // loop_pre_header
      _
    $region3: #{tpu_custom_call.1} parent=1 // loop_header
      %s12 = sphi 0, %s16
      %p13 = scmp.ge.s32.totalorder %s12, 4
      %s19 = sphi 0, %s31
      %s20 = sphi 0, %s27
      %s21 = sphi 0, %s19
      %s22 = sphi 0, %s20
      %s23 = sphi 0, %s21
      %s24 = sphi 0, %s22
      %s34 = sphi 0, %s36
      %s37 = sphi 0, %s34
      %s38 = sphi 0, %s37
      %s54 = sphi 0, %s38
      %s58 = sphi 0, %s58
      %s60 = sphi 0, %s58
      %s61 = sphi 0, %s60
      %s75 = sphi 0, %s61
      %s79 = sphi 0, %s79
      %s81 = sphi 0, %s79
      %s82 = sphi 0, %s81
      %s96 = sphi 0, %s82
      %s104 = sphi 0, %s106
      %s107 = sphi 0, %s104
      %s108 = sphi 0, %s107
      %s124 = sphi 0, %s108
    $region4: #{tpu_custom_call.1} parent=1 // loop_header_branch
      %15 = sbr.rel (%p13) target = $region8
    $region5: #{tpu_custom_call.1} parent=1 // loop_body
      %s17 = ssub.s32 %s12, 1
      %s18 = ssub.s32 %s12, 2
      %s25 = sadd.s32 1, %s20
      %p26 = scmp.ge.s32.totalorder %s25, 1
      %s27 = scalar_select %p26, 0, %s25
      %s28 = sadd.s32 1, %s19
      %s29 = scalar_select %p26, %s28, %s19
      %p30 = scmp.ge.s32.totalorder %s29, 2
      %s31 = scalar_select %p30, 0, %s29
      %s32 = ssub.s32 %s19, %s31
      %p33 = scmp.eq.s32.totalorder %s32, 0
      %s35 = sadd.s32 %s34, 1
      %s36 = scalar_select %p33, %s34, %s35
      %p39 = pneg %p33
      %p40 = scmp.eq.s32.totalorder %s12, 1
      %p41 = por %p39, %p40
      %p42 = scmp.ne.s32.totalorder %s34, %s37
      %p43 = scmp.eq.s32.totalorder %s12, 0
      %p44 = por %p42, %p43
      %p45 = scmp.ne.s32.totalorder %s34, %s37
      %p46 = scmp.eq.s32.totalorder %s17, 1
      %p47 = por %p45, %p46
      %p48 = scmp.ne.s32.totalorder %s37, %s38
      %p49 = scmp.eq.s32.totalorder %s17, 0
      %p50 = por %p48, %p49
      %p51 = scmp.ne.s32.totalorder %s37, %s38
      %p52 = scmp.eq.s32.totalorder %s18, 1
      %p53 = por %p51, %p52
      %p55 = scmp.ne.s32.totalorder %s38, %s54
      %p56 = scmp.eq.s32.totalorder %s18, 0
      %p57 = por %p55, %p56
      %s59 = sadd.s32 %s58, 1
      %p62 = scmp.eq.s32.totalorder %s12, 1
      %p63 = scmp.ne.s32.totalorder %s58, %s60
      %p64 = scmp.eq.s32.totalorder %s12, 0
      %p65 = por %p63, %p64
      %p66 = scmp.ne.s32.totalorder %s58, %s60
      %p67 = scmp.eq.s32.totalorder %s17, 1
      %p68 = por %p66, %p67
      %p69 = scmp.ne.s32.totalorder %s60, %s61
      %p70 = scmp.eq.s32.totalorder %s17, 0
      %p71 = por %p69, %p70
      %p72 = scmp.ne.s32.totalorder %s60, %s61
      %p73 = scmp.eq.s32.totalorder %s18, 1
      %p74 = por %p72, %p73
      %p76 = scmp.ne.s32.totalorder %s61, %s75
      %p77 = scmp.eq.s32.totalorder %s18, 0
      %p78 = por %p76, %p77
      %s80 = sadd.s32 %s79, 1
      %p83 = scmp.eq.s32.totalorder %s12, 1
      %p84 = scmp.ne.s32.totalorder %s79, %s81
      %p85 = scmp.eq.s32.totalorder %s12, 0
      %p86 = por %p84, %p85
      %p87 = scmp.ne.s32.totalorder %s79, %s81
      %p88 = scmp.eq.s32.totalorder %s17, 1
      %p89 = por %p87, %p88
      %p90 = scmp.ne.s32.totalorder %s81, %s82
      %p91 = scmp.eq.s32.totalorder %s17, 0
      %p92 = por %p90, %p91
      %p93 = scmp.ne.s32.totalorder %s81, %s82
      %p94 = scmp.eq.s32.totalorder %s18, 1
      %p95 = por %p93, %p94
      %p97 = scmp.ne.s32.totalorder %s82, %s96
      %p98 = scmp.eq.s32.totalorder %s18, 0
      %p99 = por %p97, %p98
      %s100 = ssub.s32 %s19, %s31
      %s101 = ssub.s32 %s20, %s27
      %s102 = sor.u32 %s100, %s101
      %p103 = scmp.eq.s32.totalorder %s102, 0
      %s105 = sadd.s32 %s104, 1
      %s106 = scalar_select %p103, %s104, %s105
      %p109 = pneg %p103
      %p110 = scmp.eq.s32.totalorder %s12, 1
      %p111 = por %p109, %p110
      %p112 = scmp.ne.s32.totalorder %s104, %s107
      %p113 = scmp.eq.s32.totalorder %s12, 0
      %p114 = por %p112, %p113
      %p115 = scmp.ne.s32.totalorder %s104, %s107
      %p116 = scmp.eq.s32.totalorder %s17, 1
      %p117 = por %p115, %p116
      %p118 = scmp.ne.s32.totalorder %s107, %s108
      %p119 = scmp.eq.s32.totalorder %s17, 0
      %p120 = por %p118, %p119
      %p121 = scmp.ne.s32.totalorder %s107, %s108
      %p122 = scmp.eq.s32.totalorder %s18, 1
      %p123 = por %p121, %p122
      %p125 = scmp.ne.s32.totalorder %s108, %s124
      %p126 = scmp.eq.s32.totalorder %s18, 0
      %p127 = por %p125, %p126
      %p128 = scmp.le.s32.totalorder 1, %s12
      %p129 = scmp.lt.s32.totalorder %s12, 3
      %p130 = pnand %p128, %p129
      %p131 = pneg %p130
      // Predicated region
      $region9: #{tpu_custom_call.1} parent=5 // pred_check
        _
      $region10: #{tpu_custom_call.1} parent=5 // pred_check_branch
        %133 = sbr.rel (%p130) target = $region12
      $region11: #{tpu_custom_call.1} parent=5 // pred_region
        %s134 = ssub.s32 %s12, 1
        // Predicated region
        $region13: #{tpu_custom_call.1} parent=11 // pred_check
          %p135 = pneg %p71
        $region14: #{tpu_custom_call.1} parent=11 // pred_check_branch
          %137 = sbr.rel (%p135) target = $region16
        $region15: #{tpu_custom_call.1} parent=11 // pred_region
          _
        $region16: #{tpu_custom_call.1} parent=11 // pred_fallthru
          _
        // Predicated region
        $region17: #{tpu_custom_call.1} parent=11 // pred_check
          %p138 = pneg %p92
        $region18: #{tpu_custom_call.1} parent=11 // pred_check_branch
          %140 = sbr.rel (%p138) target = $region20
        $region19: #{tpu_custom_call.1} parent=11 // pred_region
          _
        $region20: #{tpu_custom_call.1} parent=11 // pred_fallthru
          _
      $region12: #{tpu_custom_call.1} parent=5 // pred_fallthru
        _
      %p141 = scmp.lt.s32.totalorder %s12, 2
      // Predicated region
      $region21: #{tpu_custom_call.1} parent=5 // pred_check
        %p142 = pneg %p141
      $region22: #{tpu_custom_call.1} parent=5 // pred_check_branch
        %144 = sbr.rel (%p142) target = $region24
      $region23: #{tpu_custom_call.1} parent=5 // pred_region
        // Predicated region
        $region25: #{tpu_custom_call.1} parent=23 // pred_check
          %p145 = pneg %p44
        $region26: #{tpu_custom_call.1} parent=23 // pred_check_branch
          %147 = sbr.rel (%p145) target = $region28
        $region27: #{tpu_custom_call.1} parent=23 // pred_region
          %p148 = scmp.lt.s32.totalorder %s19, 1
          %s149 = scalar_select %p148, %s19, 1
          %s150 = smul.addr %s149, 2
          %s151 = smul.addr %s150, 4
          %s152 = scalar_lea.vmem %s0, %s151
        $region28: #{tpu_custom_call.1} parent=23 // pred_fallthru
          _
      $region24: #{tpu_custom_call.1} parent=5 // pred_fallthru
        _
      %p153 = scmp.le.s32.totalorder 1, %s12
      %p154 = scmp.lt.s32.totalorder %s12, 3
      %p155 = pnand %p153, %p154
      %p156 = pneg %p155
      // Predicated region
      $region29: #{tpu_custom_call.1} parent=5 // pred_check
        _
      $region30: #{tpu_custom_call.1} parent=5 // pred_check_branch
        %158 = sbr.rel (%p155) target = $region32
      $region31: #{tpu_custom_call.1} parent=5 // pred_region
        %s159 = ssub.s32 %s12, 1
        %p160 = scmp.lt.s32.totalorder %s21, 1
        %s161 = scalar_select %p160, %s21, 1
        %s162 = smul.addr %s161, 2
        %s163 = smul.addr %s162, 4
        %s164 = scalar_lea.vmem %s0, %s163
        %p165 = pneg %p50
        %p166 = pneg %p47
        %p167 = pneg %p71
        %p168 = pneg %p68
        %p169 = pneg %p92
        %p170 = pneg %p89
        %p171 = pneg %p120
        %p172 = pneg %p117
        %s173 = sand.u32 %s107, 1
        %s174 = scalar_lea.sflag [#allocation4], %s173
        %s175 = sand.u32 %s107, 1
        %s176 = smul.addr %s175, 8
        %s177 = scalar_lea.vmem [#allocation3], %s176
        %p178 = scmp.lt.s32.totalorder %s21, 1
        %s179 = scalar_select %p178, %s21, 1
        %s180 = smul.addr %s179, 2
        %s181 = smul.addr %s180, 4
        %s182 = scalar_lea.vmem %s0, %s181
        %s183 = smul.u32 %s22, 128
        %s184 = sshra.s32 %s183, 7
        %s185 = sand.u32 %s183, 127
        %s186 = smul.addr %s184, 4
        %s187 = scalar_lea.vmem %s182, %s186
        %v188 = vld [vmem:[%s187] sm:$0xff]
        %v189 = vld [vmem:[%s2] sm:$0xff]
        %191 = vset.pattern.permute.xlu0 0
        %192 = vperm.xlu0 %191, %v189
        %v193 = vpop.permute.xlu0 %192
        %195 = vst [vmem:[#allocation2] sm:$0xff] %v193
        %v196 = vld [vmem:[#allocation2] sm:$0xff]
        %v197 = vld [vmem:[%s1] sm:$0xff]
        %vm198 = vcmask 31744
        %v200 = vsel %vm198, %v197, 0
        %vm202 = vcmask 1043456
        %v204 = vsel %vm202, %v188, 0
        %206 = vmatprep.subr.mxu0 0.0
        %207 = vmatpush1.msra.mxu0 0.0
        %208 = vmatprep.subr.mxu0 0.0
        %209 = vmatpush1.msra.mxu0 0.0
        %210 = vmatprep.subr.mxu0 0.0
        %211 = vmatpush1.msra.mxu0 0.0
        %212 = vmatprep.subr.mxu0 0.0
        %213 = vmatpush1.msra.mxu0 0.0
        %214 = vmatprep.subr.mxu0 0.0
        %215 = vmatpush1.msra.mxu0 0.0
        %216 = vmatprep.subr.mxu0 0.0
        %217 = vmatpush1.msra.mxu0 0.0
        %218 = vmatprep.subr.mxu0 0.0
        %219 = vmatpush1.msra.mxu0 0.0
        %220 = vmatprep.subr.mxu0 0.0
        %221 = vmatpush1.msra.mxu0 0.0
        %222 = vmatprep.subr.mxu0 0.0
        %223 = vmatpush1.msra.mxu0 0.0
        %224 = vmatprep.subr.mxu0 0.0
        %225 = vmatpush1.msra.mxu0 0.0
        %226 = vmatprep.subr.mxu0 0.0
        %227 = vmatpush1.msra.mxu0 0.0
        %228 = vmatprep.subr.mxu0 0.0
        %229 = vmatpush1.msra.mxu0 0.0
        %230 = vmatprep.subr.mxu0 0.0
        %231 = vmatpush1.msra.mxu0 0.0
        %232 = vmatprep.subr.mxu0 0.0
        %233 = vmatpush1.msra.mxu0 0.0
        %234 = vmatprep.subr.mxu0 0.0
        %235 = vmatpush1.msra.mxu0 0.0
        %236 = vmatprep.subr.mxu0 0.0
        %237 = vmatpush1.msra.mxu0 %v204
        %238 = vmatprep.subr.mxu0 0.0
        %239 = vmatpush2.msra.mxu0 0.0
        %240 = vmatprep.subr.mxu0 0.0
        %241 = vmatpush2.msra.mxu0 0.0
        %242 = vmatprep.subr.mxu0 0.0
        %243 = vmatpush2.msra.mxu0 0.0
        %244 = vmatprep.subr.mxu0 0.0
        %245 = vmatpush2.msra.mxu0 0.0
        %246 = vmatprep.subr.mxu0 0.0
        %247 = vmatpush2.msra.mxu0 0.0
        %248 = vmatprep.subr.mxu0 0.0
        %249 = vmatpush2.msra.mxu0 0.0
        %250 = vmatprep.subr.mxu0 0.0
        %251 = vmatpush2.msra.mxu0 0.0
        %252 = vmatprep.subr.mxu0 0.0
        %253 = vmatpush2.msra.mxu0 0.0
        %254 = vmatprep.subr.mxu0 0.0
        %255 = vmatpush2.msra.mxu0 0.0
        %256 = vmatprep.subr.mxu0 0.0
        %257 = vmatpush2.msra.mxu0 0.0
        %258 = vmatprep.subr.mxu0 0.0
        %259 = vmatpush2.msra.mxu0 0.0
        %260 = vmatprep.subr.mxu0 0.0
        %261 = vmatpush2.msra.mxu0 0.0
        %262 = vmatprep.subr.mxu0 0.0
        %263 = vmatpush2.msra.mxu0 0.0
        %264 = vmatprep.subr.mxu0 0.0
        %265 = vmatpush2.msra.mxu0 0.0
        %266 = vmatprep.subr.mxu0 0.0
        %267 = vmatpush2.msra.mxu0 0.0
        %268 = vmatprep.subr.mxu0 0.0
        %269 = vmatpush2.msra.mxu0 0.0
        %270 = vmatprep.mubr.f32.mxu0 0.0
        %271 = vmatmul.mubr.f32.gmra.mxu0 %v200
        %v272 = vpop.f32.mrf.mxu0
        %v273 = vadd.f32 0.0, %v272
        %v274 = vpop.f32.mrf.mxu0
        %275 = vdwg.mxu0
        %v276 = vadd.f32 %v196, %v273
        %277 = vst [vmem:[#allocation2] sm:$0xff] %v276
        %v278 = vld [vmem:[#allocation2] sm:$0xff]
        %s279 = scalar_lea.vmem %s1, 8
        %v280 = vld [vmem:[%s279] sm:$0xff]
        %v281 = vcombine.high %v188, %v188
        %282 = vrot.lane.b32.xlu0 %v188, 127
        %v283 = vpop.permute.xlu0 %282
        %284 = vrot.lane.b32.xlu0 %v281, 127
        %v285 = vpop.permute.xlu0 %284
        %vm286 = vcmask 1039360
        %v287 = vsel %vm286, %v283, %v285
        %v289 = vsel %vm198, %v280, 0
        %v291 = vsel %vm202, %v287, 0
        %293 = vmatprep.subr.mxu0 0.0
        %294 = vmatpush1.msra.mxu0 0.0
        %295 = vmatprep.subr.mxu0 0.0
        %296 = vmatpush1.msra.mxu0 0.0
        %297 = vmatprep.subr.mxu0 0.0
        %298 = vmatpush1.msra.mxu0 0.0
        %299 = vmatprep.subr.mxu0 0.0
        %300 = vmatpush1.msra.mxu0 0.0
        %301 = vmatprep.subr.mxu0 0.0
        %302 = vmatpush1.msra.mxu0 0.0
        %303 = vmatprep.subr.mxu0 0.0
        %304 = vmatpush1.msra.mxu0 0.0
        %305 = vmatprep.subr.mxu0 0.0
        %306 = vmatpush1.msra.mxu0 0.0
        %307 = vmatprep.subr.mxu0 0.0
        %308 = vmatpush1.msra.mxu0 0.0
        %309 = vmatprep.subr.mxu0 0.0
        %310 = vmatpush1.msra.mxu0 0.0
        %311 = vmatprep.subr.mxu0 0.0
        %312 = vmatpush1.msra.mxu0 0.0
        %313 = vmatprep.subr.mxu0 0.0
        %314 = vmatpush1.msra.mxu0 0.0
        %315 = vmatprep.subr.mxu0 0.0
        %316 = vmatpush1.msra.mxu0 0.0
        %317 = vmatprep.subr.mxu0 0.0
        %318 = vmatpush1.msra.mxu0 0.0
        %319 = vmatprep.subr.mxu0 0.0
        %320 = vmatpush1.msra.mxu0 0.0
        %321 = vmatprep.subr.mxu0 0.0
        %322 = vmatpush1.msra.mxu0 0.0
        %323 = vmatprep.subr.mxu0 0.0
        %324 = vmatpush1.msra.mxu0 %v291
        %325 = vmatprep.subr.mxu0 0.0
        %326 = vmatpush2.msra.mxu0 0.0
        %327 = vmatprep.subr.mxu0 0.0
        %328 = vmatpush2.msra.mxu0 0.0
        %329 = vmatprep.subr.mxu0 0.0
        %330 = vmatpush2.msra.mxu0 0.0
        %331 = vmatprep.subr.mxu0 0.0
        %332 = vmatpush2.msra.mxu0 0.0
        %333 = vmatprep.subr.mxu0 0.0
        %334 = vmatpush2.msra.mxu0 0.0
        %335 = vmatprep.subr.mxu0 0.0
        %336 = vmatpush2.msra.mxu0 0.0
        %337 = vmatprep.subr.mxu0 0.0
        %338 = vmatpush2.msra.mxu0 0.0
        %339 = vmatprep.subr.mxu0 0.0
        %340 = vmatpush2.msra.mxu0 0.0
        %341 = vmatprep.subr.mxu0 0.0
        %342 = vmatpush2.msra.mxu0 0.0
        %343 = vmatprep.subr.mxu0 0.0
        %344 = vmatpush2.msra.mxu0 0.0
        %345 = vmatprep.subr.mxu0 0.0
        %346 = vmatpush2.msra.mxu0 0.0
        %347 = vmatprep.subr.mxu0 0.0
        %348 = vmatpush2.msra.mxu0 0.0
        %349 = vmatprep.subr.mxu0 0.0
        %350 = vmatpush2.msra.mxu0 0.0
        %351 = vmatprep.subr.mxu0 0.0
        %352 = vmatpush2.msra.mxu0 0.0
        %353 = vmatprep.subr.mxu0 0.0
        %354 = vmatpush2.msra.mxu0 0.0
        %355 = vmatprep.subr.mxu0 0.0
        %356 = vmatpush2.msra.mxu0 0.0
        %357 = vmatprep.mubr.f32.mxu0 0.0
        %358 = vmatmul.mubr.f32.gmra.mxu0 %v289
        %v359 = vpop.f32.mrf.mxu0
        %v360 = vadd.f32 0.0, %v359
        %v361 = vpop.f32.mrf.mxu0
        %362 = vdwg.mxu0
        %v363 = vadd.f32 %v278, %v360
        %364 = vst [vmem:[#allocation2] sm:$0xff] %v363
        %v365 = vld [vmem:[#allocation2] sm:$0xff]
        %s366 = scalar_lea.vmem %s1, 16
        %v367 = vld [vmem:[%s366] sm:$0xff]
        %368 = vrot.lane.b32.xlu0 %v188, 126
        %v369 = vpop.permute.xlu0 %368
        %370 = vrot.lane.b32.xlu0 %v281, 126
        %v371 = vpop.permute.xlu0 %370
        %vm372 = vcmask 1031168
        %v373 = vsel %vm372, %v369, %v371
        %v375 = vsel %vm198, %v367, 0
        %v377 = vsel %vm202, %v373, 0
        %379 = vmatprep.subr.mxu0 0.0
        %380 = vmatpush1.msra.mxu0 0.0
        %381 = vmatprep.subr.mxu0 0.0
        %382 = vmatpush1.msra.mxu0 0.0
        %383 = vmatprep.subr.mxu0 0.0
        %384 = vmatpush1.msra.mxu0 0.0
        %385 = vmatprep.subr.mxu0 0.0
        %386 = vmatpush1.msra.mxu0 0.0
        %387 = vmatprep.subr.mxu0 0.0
        %388 = vmatpush1.msra.mxu0 0.0
        %389 = vmatprep.subr.mxu0 0.0
        %390 = vmatpush1.msra.mxu0 0.0
        %391 = vmatprep.subr.mxu0 0.0
        %392 = vmatpush1.msra.mxu0 0.0
        %393 = vmatprep.subr.mxu0 0.0
        %394 = vmatpush1.msra.mxu0 0.0
        %395 = vmatprep.subr.mxu0 0.0
        %396 = vmatpush1.msra.mxu0 0.0
        %397 = vmatprep.subr.mxu0 0.0
        %398 = vmatpush1.msra.mxu0 0.0
        %399 = vmatprep.subr.mxu0 0.0
        %400 = vmatpush1.msra.mxu0 0.0
        %401 = vmatprep.subr.mxu0 0.0
        %402 = vmatpush1.msra.mxu0 0.0
        %403 = vmatprep.subr.mxu0 0.0
        %404 = vmatpush1.msra.mxu0 0.0
        %405 = vmatprep.subr.mxu0 0.0
        %406 = vmatpush1.msra.mxu0 0.0
        %407 = vmatprep.subr.mxu0 0.0
        %408 = vmatpush1.msra.mxu0 0.0
        %409 = vmatprep.subr.mxu0 0.0
        %410 = vmatpush1.msra.mxu0 %v377
        %411 = vmatprep.subr.mxu0 0.0
        %412 = vmatpush2.msra.mxu0 0.0
        %413 = vmatprep.subr.mxu0 0.0
        %414 = vmatpush2.msra.mxu0 0.0
        %415 = vmatprep.subr.mxu0 0.0
        %416 = vmatpush2.msra.mxu0 0.0
        %417 = vmatprep.subr.mxu0 0.0
        %418 = vmatpush2.msra.mxu0 0.0
        %419 = vmatprep.subr.mxu0 0.0
        %420 = vmatpush2.msra.mxu0 0.0
        %421 = vmatprep.subr.mxu0 0.0
        %422 = vmatpush2.msra.mxu0 0.0
        %423 = vmatprep.subr.mxu0 0.0
        %424 = vmatpush2.msra.mxu0 0.0
        %425 = vmatprep.subr.mxu0 0.0
        %426 = vmatpush2.msra.mxu0 0.0
        %427 = vmatprep.subr.mxu0 0.0
        %428 = vmatpush2.msra.mxu0 0.0
        %429 = vmatprep.subr.mxu0 0.0
        %430 = vmatpush2.msra.mxu0 0.0
        %431 = vmatprep.subr.mxu0 0.0
        %432 = vmatpush2.msra.mxu0 0.0
        %433 = vmatprep.subr.mxu0 0.0
        %434 = vmatpush2.msra.mxu0 0.0
        %435 = vmatprep.subr.mxu0 0.0
        %436 = vmatpush2.msra.mxu0 0.0
        %437 = vmatprep.subr.mxu0 0.0
        %438 = vmatpush2.msra.mxu0 0.0
        %439 = vmatprep.subr.mxu0 0.0
        %440 = vmatpush2.msra.mxu0 0.0
        %441 = vmatprep.subr.mxu0 0.0
        %442 = vmatpush2.msra.mxu0 0.0
        %443 = vmatprep.mubr.f32.mxu0 0.0
        %444 = vmatmul.mubr.f32.gmra.mxu0 %v375
        %v445 = vpop.f32.mrf.mxu0
        %v446 = vadd.f32 0.0, %v445
        %v447 = vpop.f32.mrf.mxu0
        %448 = vdwg.mxu0
        %v449 = vadd.f32 %v365, %v446
        %450 = vst [vmem:[#allocation2] sm:$0xff] %v449
        %v451 = vld [vmem:[#allocation2] sm:$0xff]
        %s452 = scalar_lea.vmem %s1, 24
        %v453 = vld [vmem:[%s452] sm:$0xff]
        %454 = vrot.lane.b32.xlu0 %v188, 125
        %v455 = vpop.permute.xlu0 %454
        %456 = vrot.lane.b32.xlu0 %v281, 125
        %v457 = vpop.permute.xlu0 %456
        %vm458 = vcmask 1022976
        %v459 = vsel %vm458, %v455, %v457
        %v461 = vsel %vm198, %v453, 0
        %v463 = vsel %vm202, %v459, 0
        %465 = vmatprep.subr.mxu0 0.0
        %466 = vmatpush1.msra.mxu0 0.0
        %467 = vmatprep.subr.mxu0 0.0
        %468 = vmatpush1.msra.mxu0 0.0
        %469 = vmatprep.subr.mxu0 0.0
        %470 = vmatpush1.msra.mxu0 0.0
        %471 = vmatprep.subr.mxu0 0.0
        %472 = vmatpush1.msra.mxu0 0.0
        %473 = vmatprep.subr.mxu0 0.0
        %474 = vmatpush1.msra.mxu0 0.0
        %475 = vmatprep.subr.mxu0 0.0
        %476 = vmatpush1.msra.mxu0 0.0
        %477 = vmatprep.subr.mxu0 0.0
        %478 = vmatpush1.msra.mxu0 0.0
        %479 = vmatprep.subr.mxu0 0.0
        %480 = vmatpush1.msra.mxu0 0.0
        %481 = vmatprep.subr.mxu0 0.0
        %482 = vmatpush1.msra.mxu0 0.0
        %483 = vmatprep.subr.mxu0 0.0
        %484 = vmatpush1.msra.mxu0 0.0
        %485 = vmatprep.subr.mxu0 0.0
        %486 = vmatpush1.msra.mxu0 0.0
        %487 = vmatprep.subr.mxu0 0.0
        %488 = vmatpush1.msra.mxu0 0.0
        %489 = vmatprep.subr.mxu0 0.0
        %490 = vmatpush1.msra.mxu0 0.0
        %491 = vmatprep.subr.mxu0 0.0
        %492 = vmatpush1.msra.mxu0 0.0
        %493 = vmatprep.subr.mxu0 0.0
        %494 = vmatpush1.msra.mxu0 0.0
        %495 = vmatprep.subr.mxu0 0.0
        %496 = vmatpush1.msra.mxu0 %v463
        %497 = vmatprep.subr.mxu0 0.0
        %498 = vmatpush2.msra.mxu0 0.0
        %499 = vmatprep.subr.mxu0 0.0
        %500 = vmatpush2.msra.mxu0 0.0
        %501 = vmatprep.subr.mxu0 0.0
        %502 = vmatpush2.msra.mxu0 0.0
        %503 = vmatprep.subr.mxu0 0.0
        %504 = vmatpush2.msra.mxu0 0.0
        %505 = vmatprep.subr.mxu0 0.0
        %506 = vmatpush2.msra.mxu0 0.0
        %507 = vmatprep.subr.mxu0 0.0
        %508 = vmatpush2.msra.mxu0 0.0
        %509 = vmatprep.subr.mxu0 0.0
        %510 = vmatpush2.msra.mxu0 0.0
        %511 = vmatprep.subr.mxu0 0.0
        %512 = vmatpush2.msra.mxu0 0.0
        %513 = vmatprep.subr.mxu0 0.0
        %514 = vmatpush2.msra.mxu0 0.0
        %515 = vmatprep.subr.mxu0 0.0
        %516 = vmatpush2.msra.mxu0 0.0
        %517 = vmatprep.subr.mxu0 0.0
        %518 = vmatpush2.msra.mxu0 0.0
        %519 = vmatprep.subr.mxu0 0.0
        %520 = vmatpush2.msra.mxu0 0.0
        %521 = vmatprep.subr.mxu0 0.0
        %522 = vmatpush2.msra.mxu0 0.0
        %523 = vmatprep.subr.mxu0 0.0
        %524 = vmatpush2.msra.mxu0 0.0
        %525 = vmatprep.subr.mxu0 0.0
        %526 = vmatpush2.msra.mxu0 0.0
        %527 = vmatprep.subr.mxu0 0.0
        %528 = vmatpush2.msra.mxu0 0.0
        %529 = vmatprep.mubr.f32.mxu0 0.0
        %530 = vmatmul.mubr.f32.gmra.mxu0 %v461
        %v531 = vpop.f32.mrf.mxu0
        %v532 = vadd.f32 0.0, %v531
        %v533 = vpop.f32.mrf.mxu0
        %534 = vdwg.mxu0
        %v535 = vadd.f32 %v451, %v532
        %536 = vst [vmem:[#allocation2] sm:$0xff] %v535
        %v537 = vld [vmem:[#allocation2] sm:$0xff]
        %538 = vst [vmem:[%s177] sm:$0xff] %v537
        %s539 = sand.u32 %s107, 1
        %s540 = scalar_lea.sflag [#allocation4], %s539
        %s541 = sand.u32 %s107, 1
        %s542 = smul.addr %s541, 8
        %s543 = scalar_lea.vmem [#allocation3], %s542
        // Predicated region
        $region33: #{tpu_custom_call.1} parent=31 // pred_check
          %p544 = pneg %p117
        $region34: #{tpu_custom_call.1} parent=31 // pred_check_branch
          %546 = sbr.rel (%p544) target = $region36
        $region35: #{tpu_custom_call.1} parent=31 // pred_region
          %s548 = ssub.s32 128, 128
          %549 = vsyncadd %s540, %s548
          %s550 = sadd.s32 %s22, %s21
          %s551 = smul.addr %s550, 128
          %s552 = scalar_lea.hbm %s3, %s551
          %s554 = sshll.u32 %s543, 4
          %s555 = int_to_ptr.vmem [resolvable:$true] %s554
          %557 = dma.vmem_to_hbm [thread:$0]  %s555, 128, %s552, %s540
        $region36: #{tpu_custom_call.1} parent=31 // pred_fallthru
          _
      $region32: #{tpu_custom_call.1} parent=5 // pred_fallthru
        _
      %p558 = scmp.le.s32.totalorder 2, %s12
      // Predicated region
      $region37: #{tpu_custom_call.1} parent=5 // pred_check
        %p559 = pneg %p558
      $region38: #{tpu_custom_call.1} parent=5 // pred_check_branch
        %561 = sbr.rel (%p559) target = $region40
      $region39: #{tpu_custom_call.1} parent=5 // pred_region
        %s562 = ssub.s32 %s12, 2
        // Predicated region
        $region41: #{tpu_custom_call.1} parent=39 // pred_check
          %p563 = pneg %p123
        $region42: #{tpu_custom_call.1} parent=39 // pred_check_branch
          %565 = sbr.rel (%p563) target = $region44
        $region43: #{tpu_custom_call.1} parent=39 // pred_region
          %s566 = sand.u32 %s108, 1
          %s567 = scalar_lea.sflag [#allocation4], %s566
          %s568 = sand.u32 %s108, 1
          %s569 = smul.addr %s568, 8
          %s570 = scalar_lea.vmem [#allocation3], %s569
          %571 = dma.done %s567, 128
        $region44: #{tpu_custom_call.1} parent=39 // pred_fallthru
          _
      $region40: #{tpu_custom_call.1} parent=5 // pred_fallthru
        _
    $region6: #{tpu_custom_call.1} parent=1 // loop_footer
      %s16 = sadd.s32 1, %s12
    $region7: #{tpu_custom_call.1} parent=1 // loop_footer_branch
      %11 = sbr.rel target = $region3
    $region8: #{tpu_custom_call.1} parent=1 // loop_exit
      _
    %572 = vsyncpa [#allocation4], 1
    %s573 = scalar_lea.sflag [#allocation4], 1
    %574 = vsyncpa %s573, 1

</llo_original>
